<compile_context>
chip_gen: v7x
topology: tpu7x:2x2x1
jax: 0.10.0
libtpu: 0.0.40
codegen_flags: <defaults>
</compile_context>

<pallas_src>
import functools
import math

import jax
import jax.numpy as jnp
from jax.experimental import pallas as pl
from jax.experimental.pallas import tpu as pltpu


_EPS = 1e-6
_VMEM_LIMIT_BYTES = 48 * 1024 * 1024


# ---------------------------------------------------------------------------
# In-kernel helpers (f32 elementwise math)
# ---------------------------------------------------------------------------
def _layernorm_f32(x, eps=_EPS):
    mu = jnp.mean(x, axis=-1, keepdims=True)
    var = jnp.mean((x - mu) ** 2, axis=-1, keepdims=True)
    return (x - mu) * jax.lax.rsqrt(var + eps)


def _gelu_tanh(x):
    c = 0.7978845608028654  # sqrt(2/pi)
    return 0.5 * x * (1.0 + jnp.tanh(c * (x + 0.044715 * x * x * x)))


def _seq_tile(n, preferred=256):
    # Prefer 256-row tiles (full systolic width on v6e/v7x); fall back cleanly.
    if n % preferred == 0:
        return preferred
    if n % 128 == 0:
        return 128
    return n


# ---------------------------------------------------------------------------
# Kernel 1: LN1 + adaLN modulate + QKV projection (q pre-scaled by 1/sqrt(hd))
#   grid = (B, N // TN)
# ---------------------------------------------------------------------------
def qkv_kernel(x_ref, mods_ref, w_qkv_ref, b_qkv_ref, qkv_ref, *,
               num_heads, mxu_dtype):
    H = x_ref.shape[2]
    hd = H // num_heads
    q_scale = float(hd) ** -0.5

    x = x_ref[0].astype(jnp.float32)            # (TN, H)
    mods = mods_ref[0].astype(jnp.float32)      # (6, H)
    shift_msa = mods[0:1]
    scale_msa = mods[1:2]

    h = _layernorm_f32(x) * (1.0 + scale_msa) + shift_msa
    qkv = jnp.dot(h.astype(mxu_dtype), w_qkv_ref[...],
                  preferred_element_type=jnp.float32) + b_qkv_ref[...]  # (TN, 3H)

    # Fold 1/sqrt(hd) into q (first H columns) instead of scaling (N,N) scores.
    col = jax.lax.broadcasted_iota(jnp.int32, (1, 3 * H), 1)
    qkv = qkv * jnp.where(col < H, q_scale, 1.0)

    qkv_ref[0] = qkv.astype(qkv_ref.dtype)


# ---------------------------------------------------------------------------
# Kernel 2: flash attention, heads batched, online softmax over K/V tiles
#   grid = (B, N // TQ, N // TK)   -- last axis is the reduction ("arbitrary")
# ---------------------------------------------------------------------------
def flash_attn_kernel(q_ref, k_ref, v_ref, o_ref, m_sc, l_sc, acc_sc):
    ki = pl.program_id(2)

    @pl.when(ki == 0)
    def _():
        m_sc[...] = jnp.full(m_sc.shape, -jnp.inf, dtype=m_sc.dtype)
        l_sc[...] = jnp.zeros(l_sc.shape, dtype=l_sc.dtype)
        acc_sc[...] = jnp.zeros(acc_sc.shape, dtype=acc_sc.dtype)

    q = q_ref[0]                                 # (nh, TQ, hd) bf16, pre-scaled
    k = k_ref[0]                                 # (nh, TK, hd)
    v = v_ref[0]                                 # (nh, TK, hd)

    s = jnp.einsum('hqd,hkd->hqk', q, k,
                   preferred_element_type=jnp.float32)         # (nh, TQ, TK)

    m_prev = m_sc[...]
    m_new = jnp.maximum(m_prev, jnp.max(s, axis=-1, keepdims=True))
    alpha = jnp.exp(m_prev - m_new)
    p = jnp.exp(s - m_new)

    l_sc[...] = alpha * l_sc[...] + jnp.sum(p, axis=-1, keepdims=True)
    pv = jnp.einsum('hqk,hkd->hqd', p.astype(v.dtype), v,
                    preferred_element_type=jnp.float32)
    acc_sc[...] = alpha * acc_sc[...] + pv
    m_sc[...] = m_new

    @pl.when(ki == pl.num_programs(2) - 1)
    def _():
        inv_l = pl.reciprocal(l_sc[...], approx=True)
        o_ref[0] = (acc_sc[...] * inv_l).astype(o_ref.dtype)


# ---------------------------------------------------------------------------
# Kernel 3: attention out-proj + gated residual + LN2 + modulate + MLP + residual
#   grid = (B, N // TN)
# ---------------------------------------------------------------------------
def out_mlp_kernel(x_ref, attn_ref, mods_ref,
                   w_proj_ref, b_proj_ref, w_fc1_ref, b_fc1_ref,
                   w_fc2_ref, b_fc2_ref, o_ref, *, mxu_dtype):
    x = x_ref[0].astype(jnp.float32)            # (TN, H)
    mods = mods_ref[0].astype(jnp.float32)      # (6, H)
    gate_msa = mods[2:3]
    shift_mlp = mods[3:4]
    scale_mlp = mods[4:5]
    gate_mlp = mods[5:6]

    attn = jnp.dot(attn_ref[0].astype(mxu_dtype), w_proj_ref[...],
                   preferred_element_type=jnp.float32) + b_proj_ref[...]
    x = x + gate_msa * attn

    h = _layernorm_f32(x) * (1.0 + scale_mlp) + shift_mlp
    m = jnp.dot(h.astype(mxu_dtype), w_fc1_ref[...],
                preferred_element_type=jnp.float32) + b_fc1_ref[...]
    m = _gelu_tanh(m)
    m = jnp.dot(m.astype(mxu_dtype), w_fc2_ref[...],
                preferred_element_type=jnp.float32) + b_fc2_ref[...]

    o_ref[0] = (x + gate_mlp * m).astype(o_ref.dtype)


# ---------------------------------------------------------------------------
# Wrapper
# ---------------------------------------------------------------------------
def dit_block(x, c, params, num_heads, *, matmul_dtype=jnp.bfloat16):
    B, N, H = x.shape
    nh = num_heads
    hd = H // nh
    MH = params['w_fc1'].shape[1]
    f32 = jnp.float32

    # adaLN (M=1 matmul) in plain XLA: keeps w_ada (6*H^2) out of VMEM entirely.
    ada = (jax.nn.silu(c.astype(f32)) @ params['w_ada'].astype(f32)
           + params['b_ada'][0].astype(f32))                 # (B, 6H)
    mods = ada.reshape(B, 6, H)                              # (B, 6, H) f32

    # Weights in bf16 for the MXU; biases stay f32 (added after f32 accumulation).
    w_qkv = params['w_qkv'].astype(matmul_dtype)
    w_proj = params['w_proj'].astype(matmul_dtype)
    w_fc1 = params['w_fc1'].astype(matmul_dtype)
    w_fc2 = params['w_fc2'].astype(matmul_dtype)
    b_qkv = params['b_qkv'].astype(f32)
    b_proj = params['b_proj'].astype(f32)
    b_fc1 = params['b_fc1'].astype(f32)
    b_fc2 = params['b_fc2'].astype(f32)

    TN = _seq_tile(N)
    NT = N // TN

    cp2 = pltpu.CompilerParams(
        dimension_semantics=("parallel", "parallel"),
        vmem_limit_bytes=_VMEM_LIMIT_BYTES)

    # --- kernel 1: LN1 + modulate + QKV -----------------------------------
    qkv = pl.pallas_call(
        functools.partial(qkv_kernel, num_heads=nh, mxu_dtype=matmul_dtype),
        out_shape=jax.ShapeDtypeStruct((B, N, 3 * H), matmul_dtype),
        grid=(B, NT),
        in_specs=[
            pl.BlockSpec((1, TN, H), lambda b, n: (b, n, 0)),
            pl.BlockSpec((1, 6, H), lambda b, n: (b, 0, 0)),
            # Constant-index weight blocks: fetched once, revisited across the grid.
            pl.BlockSpec((H, 3 * H), lambda b, n: (0, 0)),
            pl.BlockSpec((1, 3 * H), lambda b, n: (0, 0)),
        ],
        out_specs=pl.BlockSpec((1, TN, 3 * H), lambda b, n: (b, n, 0)),
        compiler_params=cp2,
    )(x, mods, w_qkv, b_qkv)

    # Head split: layout plumbing in XLA (avoids in-kernel relayout reshapes).
    qkv_h = qkv.reshape(B, N, 3, nh, hd).transpose(2, 0, 3, 1, 4)  # (3,B,nh,N,hd)
    q, k, v = qkv_h[0], qkv_h[1], qkv_h[2]

    # --- kernel 2: flash attention -----------------------------------------
    TQ = _seq_tile(N)
    TK = _seq_tile(N)
    QT, KT = N // TQ, N // TK

    attn_heads = pl.pallas_call(
        flash_attn_kernel,
        out_shape=jax.ShapeDtypeStruct((B, nh, N, hd), matmul_dtype),
        grid=(B, QT, KT),
        in_specs=[
            pl.BlockSpec((1, nh, TQ, hd), lambda b, qi, ki: (b, 0, qi, 0)),
            pl.BlockSpec((1, nh, TK, hd), lambda b, qi, ki: (b, 0, ki, 0)),
            pl.BlockSpec((1, nh, TK, hd), lambda b, qi, ki: (b, 0, ki, 0)),
        ],
        out_specs=pl.BlockSpec((1, nh, TQ, hd), lambda b, qi, ki: (b, 0, qi, 0)),
        scratch_shapes=[
            pltpu.VMEM((nh, TQ, 1), jnp.float32),    # running max
            pltpu.VMEM((nh, TQ, 1), jnp.float32),    # running sum
            pltpu.VMEM((nh, TQ, hd), jnp.float32),   # output accumulator
        ],
        compiler_params=pltpu.CompilerParams(
            dimension_semantics=("parallel", "parallel", "arbitrary"),
            vmem_limit_bytes=_VMEM_LIMIT_BYTES),
    )(q, k, v)

    # Head merge back to (B, N, H): layout plumbing in XLA.
    attn_merged = attn_heads.transpose(0, 2, 1, 3).reshape(B, N, H)

    # --- kernel 3: out-proj + residual + LN2 + modulate + MLP + residual ----
    out = pl.pallas_call(
        functools.partial(out_mlp_kernel, mxu_dtype=matmul_dtype),
        out_shape=jax.ShapeDtypeStruct((B, N, H), x.dtype),
        grid=(B, NT),
        in_specs=[
            pl.BlockSpec((1, TN, H), lambda b, n: (b, n, 0)),   # x
            pl.BlockSpec((1, TN, H), lambda b, n: (b, n, 0)),   # attn (merged)
            pl.BlockSpec((1, 6, H), lambda b, n: (b, 0, 0)),    # modulation
            pl.BlockSpec((H, H), lambda b, n: (0, 0)),          # w_proj
            pl.BlockSpec((1, H), lambda b, n: (0, 0)),          # b_proj
            pl.BlockSpec((H, MH), lambda b, n: (0, 0)),         # w_fc1
            pl.BlockSpec((1, MH), lambda b, n: (0, 0)),         # b_fc1
            pl.BlockSpec((MH, H), lambda b, n: (0, 0)),         # w_fc2
            pl.BlockSpec((1, H), lambda b, n: (0, 0)),          # b_fc2
        ],
        out_specs=pl.BlockSpec((1, TN, H), lambda b, n: (b, n, 0)),
        compiler_params=cp2,
    )(x, attn_merged, mods, w_proj, b_proj, w_fc1, b_fc1, w_fc2, b_fc2)

    return out


# ---------------------------------------------------------------------------
# Pure-JAX reference (mirrors PyTorch DiTBlock.forward); matmul inputs are cast
# to `matmul_dtype` with f32 accumulation so precision matches the kernel path.
# ---------------------------------------------------------------------------
def dit_block_ref(x, c, params, num_heads, matmul_dtype=jnp.float32):
    B, N, H = x.shape
    hd = H // num_heads

    def mm(a, b):
        return jnp.dot(a.astype(matmul_dtype), b.astype(matmul_dtype),
                       preferred_element_type=jnp.float32)

    def ln(y):
        mu = y.mean(-1, keepdims=True)
        var = ((y - mu) ** 2).mean(-1, keepdims=True)
        return (y - mu) / jnp.sqrt(var + 1e-6)

    def mod(y, sh, sc):
        return y * (1 + sc[:, None, :]) + sh[:, None, :]

    ada = jax.nn.silu(c) @ params['w_ada'] + params['b_ada'][0]
    shift_msa, scale_msa, gate_msa, shift_mlp, scale_mlp, gate_mlp = \
        jnp.split(ada, 6, axis=-1)

    h = mod(ln(x), shift_msa, scale_msa)
    qkv = mm(h, params['w_qkv']) + params['b_qkv'][0]
    qkv = qkv.reshape(B, N, 3, num_heads, hd)
    q = qkv[:, :, 0].transpose(0, 2, 1, 3) * (hd ** -0.5)
    k = qkv[:, :, 1].transpose(0, 2, 1, 3)
    v = qkv[:, :, 2].transpose(0, 2, 1, 3)
    s = jnp.einsum('bhnd,bhmd->bhnm', q.astype(matmul_dtype),
                   k.astype(matmul_dtype), preferred_element_type=jnp.float32)
    p = jax.nn.softmax(s, axis=-1)
    o = jnp.einsum('bhnm,bhmd->bhnd', p.astype(matmul_dtype),
                   v.astype(matmul_dtype), preferred_element_type=jnp.float32)
    o = o.transpose(0, 2, 1, 3).reshape(B, N, H)
    o = mm(o, params['w_proj']) + params['b_proj'][0]
    x = x + gate_msa[:, None, :] * o

    h = mod(ln(x), shift_mlp, scale_mlp)
    m = mm(h, params['w_fc1']) + params['b_fc1'][0]
    m = 0.5 * m * (1 + jnp.tanh(math.sqrt(2 / math.pi) * (m + 0.044715 * m ** 3)))
    m = mm(m, params['w_fc2']) + params['b_fc2'][0]
    return x + gate_mlp[:, None, :] * m


# ---------------------------------------------------------------------------
# Main
# ---------------------------------------------------------------------------
if __name__ == "__main__":
    B, N, H = 2, 8, 32          # batch, sequence, hidden
    num_heads = 4
    mlp_ratio = 4.0
    MH = int(H * mlp_ratio)

    key = jax.random.PRNGKey(0)
    ks = jax.random.split(key, 12)

    def rnd(k, shape, s=0.05):
        return (s * jax.random.normal(k, shape)).astype(jnp.float32)

    x = rnd(ks[0], (B, N, H), s=1.0)
    c = rnd(ks[1], (B, H), s=1.0)

    params = {
        'w_ada':  rnd(ks[2], (H, 6 * H)),
        'b_ada':  rnd(ks[3], (1, 6 * H)),
        'w_qkv':  rnd(ks[4], (H, 3 * H)),
        'b_qkv':  rnd(ks[5], (1, 3 * H)),
        'w_proj': rnd(ks[6], (H, H)),
        'b_proj': rnd(ks[7], (1, H)),
        'w_fc1':  rnd(ks[8], (H, MH)),
        'b_fc1':  rnd(ks[9], (1, MH)),
        'w_fc2':  rnd(ks[10], (MH, H)),
        'b_fc2':  rnd(ks[11], (1, H)),
    }

    out = dit_block(x, c, params, num_heads, matmul_dtype=jnp.bfloat16)
    out = jax.block_until_ready(out)
    assert out.shape == (B, N, H)

    ref = dit_block_ref(x, c, params, num_heads, matmul_dtype=jnp.bfloat16)
    max_err = float(jnp.max(jnp.abs(out - ref)))
    assert jnp.allclose(out, ref, atol=1e-2, rtol=1e-2), f"max abs err {max_err}"

    print("KERNEL_OK")
</pallas_src>

<mosaic_0001>
module attributes {stable_mosaic.version = 11 : i64} {
  func.func @qkv_kernel(%arg0: i32, %arg1: i32, %arg2: memref<1x8x32xf32, #tpu.memory_space<vmem>>, %arg3: memref<1x6x32xf32, #tpu.memory_space<vmem>>, %arg4: memref<32x96xbf16, #tpu.memory_space<vmem>>, %arg5: memref<1x96xf32, #tpu.memory_space<vmem>>, %arg6: memref<1x8x96xbf16, #tpu.memory_space<vmem>>) attributes {dimension_semantics = [#tpu.dimension_semantics<parallel>, #tpu.dimension_semantics<parallel>], iteration_bounds = array<i64: 2, 1>, scalar_prefetch = 0 : i64, scratch_operands = 0 : i64, tpu.core_type = #tpu.core_type<tc>, window_params = [{transform_indices = @transform_0, window_bounds = array<i64: 1, 8, 32>}, {transform_indices = @transform_1, window_bounds = array<i64: 1, 6, 32>}, {pipeline_mode = #tpu.pipeline_mode<synchronous>, transform_indices = @transform_2, window_bounds = array<i64: 32, 96>}, {pipeline_mode = #tpu.pipeline_mode<synchronous>, transform_indices = @transform_3, window_bounds = array<i64: 1, 96>}, {transform_indices = @transform_4, window_bounds = array<i64: 1, 8, 96>}]} {
    %c0 = arith.constant 0 : index
    %c0_0 = arith.constant 0 : index
    %c0_1 = arith.constant 0 : index
    %0 = vector.load %arg2[%c0, %c0_0, %c0_1] : memref<1x8x32xf32, #tpu.memory_space<vmem>>, vector<1x8x32xf32>
    %1 = vector.shape_cast %0 : vector<1x8x32xf32> to vector<8x32xf32>
    %c0_2 = arith.constant 0 : index
    %c0_3 = arith.constant 0 : index
    %c0_4 = arith.constant 0 : index
    %2 = vector.load %arg3[%c0_2, %c0_3, %c0_4] : memref<1x6x32xf32, #tpu.memory_space<vmem>>, vector<1x6x32xf32>
    %3 = vector.shape_cast %2 : vector<1x6x32xf32> to vector<6x32xf32>
    %4 = vector.extract_strided_slice %3 {offsets = [0, 0], sizes = [1, 32], strides = [1, 1]} : vector<6x32xf32> to vector<1x32xf32>
    %5 = vector.extract_strided_slice %3 {offsets = [1, 0], sizes = [1, 32], strides = [1, 1]} : vector<6x32xf32> to vector<1x32xf32>
    %cst = arith.constant dense<0.000000e+00> : vector<8xf32>
    %6 = vector.multi_reduction <add>, %1, %cst [1] : vector<8x32xf32> to vector<8xf32>
    %7 = vector.shape_cast %6 : vector<8xf32> to vector<8x1xf32>
    %cst_5 = arith.constant 3.200000e+01 : f32
    %8 = vector.broadcast %cst_5 : f32 to vector<8x1xf32>
    %9 = arith.divf %7, %8 : vector<8x1xf32>
    %10 = vector.broadcast %9 : vector<8x1xf32> to vector<8x32xf32>
    %11 = arith.subf %1, %10 : vector<8x32xf32>
    %12 = arith.mulf %11, %11 : vector<8x32xf32>
    %cst_6 = arith.constant dense<0.000000e+00> : vector<8xf32>
    %13 = vector.multi_reduction <add>, %12, %cst_6 [1] : vector<8x32xf32> to vector<8xf32>
    %14 = vector.shape_cast %13 : vector<8xf32> to vector<8x1xf32>
    %cst_7 = arith.constant 3.200000e+01 : f32
    %15 = vector.broadcast %cst_7 : f32 to vector<8x1xf32>
    %16 = arith.divf %14, %15 : vector<8x1xf32>
    %17 = vector.broadcast %9 : vector<8x1xf32> to vector<8x32xf32>
    %18 = arith.subf %1, %17 : vector<8x32xf32>
    %cst_8 = arith.constant 9.99999997E-7 : f32
    %19 = vector.broadcast %cst_8 : f32 to vector<8x1xf32>
    %20 = arith.addf %16, %19 : vector<8x1xf32>
    %21 = math.rsqrt %20 : vector<8x1xf32>
    %22 = vector.broadcast %21 : vector<8x1xf32> to vector<8x32xf32>
    %23 = arith.mulf %18, %22 : vector<8x32xf32>
    %cst_9 = arith.constant 1.000000e+00 : f32
    %24 = vector.broadcast %cst_9 : f32 to vector<1x32xf32>
    %25 = arith.addf %24, %5 : vector<1x32xf32>
    %26 = vector.broadcast %25 : vector<1x32xf32> to vector<8x32xf32>
    %27 = arith.mulf %23, %26 : vector<8x32xf32>
    %28 = vector.broadcast %4 : vector<1x32xf32> to vector<8x32xf32>
    %29 = arith.addf %27, %28 : vector<8x32xf32>
    %30 = arith.truncf %29 : vector<8x32xf32> to vector<8x32xbf16>
    %c0_10 = arith.constant 0 : index
    %c0_11 = arith.constant 0 : index
    %31 = vector.load %arg4[%c0_10, %c0_11] : memref<32x96xbf16, #tpu.memory_space<vmem>>, vector<32x96xbf16>
    %cst_12 = arith.constant dense<0.000000e+00> : vector<8x96xf32>
    %32 = tpu.matmul %30, %31, %cst_12 {dimension_numbers = #tpu.dot_dimension_numbers<[1], [0], [0], [1], [0, 0, 1, 1], [], []>} : vector<8x32xbf16>, vector<32x96xbf16>, vector<8x96xf32> -> vector<8x96xf32>
    %c0_13 = arith.constant 0 : index
    %c0_14 = arith.constant 0 : index
    %33 = vector.load %arg5[%c0_13, %c0_14] : memref<1x96xf32, #tpu.memory_space<vmem>>, vector<1x96xf32>
    %34 = vector.broadcast %33 : vector<1x96xf32> to vector<8x96xf32>
    %35 = arith.addf %32, %34 : vector<8x96xf32>
    %36 = tpu.iota {dimensions = array<i32: 1>} : vector<1x96xi32>
    %c32_i32 = arith.constant 32 : i32
    %37 = vector.broadcast %c32_i32 : i32 to vector<1x96xi32>
    %38 = arith.cmpi slt, %36, %37 : vector<1x96xi32>
    %cst_15 = arith.constant 0.353553385 : f32
    %cst_16 = arith.constant 1.000000e+00 : f32
    %39 = vector.broadcast %cst_15 : f32 to vector<1x96xf32>
    %40 = vector.broadcast %cst_16 : f32 to vector<1x96xf32>
    %41 = arith.select %38, %39, %40 : vector<1x96xi1>, vector<1x96xf32>
    %42 = vector.broadcast %41 : vector<1x96xf32> to vector<8x96xf32>
    %43 = arith.mulf %35, %42 : vector<8x96xf32>
    %44 = arith.truncf %43 : vector<8x96xf32> to vector<8x96xbf16>
    %c0_17 = arith.constant 0 : index
    %c0_18 = arith.constant 0 : index
    %c0_19 = arith.constant 0 : index
    %45 = vector.load %arg6[%c0_17, %c0_18, %c0_19] : memref<1x8x96xbf16, #tpu.memory_space<vmem>>, vector<1x8x96xbf16>
    %46 = vector.shape_cast %45 : vector<1x8x96xbf16> to vector<8x96xbf16>
    %47 = vector.shape_cast %44 : vector<8x96xbf16> to vector<1x8x96xbf16>
    tpu.vector_store %arg6[%c0_17, %c0_18, %c0_19], %47 {strides = array<i32>} : memref<1x8x96xbf16, #tpu.memory_space<vmem>>, vector<1x8x96xbf16>,
    return
  }
  func.func @transform_0(%arg0: i32, %arg1: i32) -> (i32, i32, i32) {
    %c0_i32 = arith.constant 0 : i32
    %c0_i32_0 = arith.constant 0 : i32
    return %arg0, %arg1, %c0_i32 : i32, i32, i32
  }
  func.func @transform_1(%arg0: i32, %arg1: i32) -> (i32, i32, i32) {
    %c0_i32 = arith.constant 0 : i32
    %c0_i32_0 = arith.constant 0 : i32
    %c0_i32_1 = arith.constant 0 : i32
    return %arg0, %c0_i32, %c0_i32_0 : i32, i32, i32
  }
  func.func @transform_2(%arg0: i32, %arg1: i32) -> (i32, i32) {
    %c0_i32 = arith.constant 0 : i32
    %c0_i32_0 = arith.constant 0 : i32
    %c0_i32_1 = arith.constant 0 : i32
    return %c0_i32, %c0_i32_0 : i32, i32
  }
  func.func @transform_3(%arg0: i32, %arg1: i32) -> (i32, i32) {
    %c0_i32 = arith.constant 0 : i32
    %c0_i32_0 = arith.constant 0 : i32
    %c0_i32_1 = arith.constant 0 : i32
    return %c0_i32, %c0_i32_0 : i32, i32
  }
  func.func @transform_4(%arg0: i32, %arg1: i32) -> (i32, i32, i32) {
    %c0_i32 = arith.constant 0 : i32
    %c0_i32_0 = arith.constant 0 : i32
    return %arg0, %arg1, %c0_i32 : i32, i32, i32
  }
}

</mosaic_0001>

<llo_original>
// kernel: tpu_custom_call.1
$region0: #{tpu_custom_call.1}
  #allocation0 [shape = 'u32[]', space=smem, size = 0x4, offset = 0x4, fixed_abs, tag = 'smem constant byte address 0x4 - core index']
  #allocation1 [shape = 'u32[144,128]{1,0:T(1,128)}', space=vmem, size = 0x12000, scoped, tag = 'internal scratch']
  %s0 = inlined_call_operand.vmem [shape: f32[2,8,32], index: 0, kind: input, shape index: {}]
  %s1 = inlined_call_operand.vmem [shape: f32[2,6,32], index: 1, kind: input, shape index: {}]
  %s2 = inlined_call_operand.vmem [shape: bf16[32,96], index: 2, kind: input, shape index: {}]
  %s3 = inlined_call_operand.vmem [shape: f32[1,96], index: 3, kind: input, shape index: {}]
  %s4 = inlined_call_operand.hbm [shape: bf16[2,8,96], index: 4, kind: output, shape index: {}]
  %s5 = sld [smem:[#allocation0]]
  $region49: #{tpu_custom_call.1} parent=0
    _
  %s7 = ssub.s32 1, %s5
  %s8 = scalar_select 0, %s7, %s5
  $region1: #{tpu_custom_call.1} parent=0
    #allocation2 [shape = 'u8[4096]{0}', space=vmem, size = 0x1000, scoped, tag = 'output window, operand 0']
    #allocation3 [shape = 's32[2]{0}', space=sflag, size = 0x8, scoped, tag = 'scoped memory for tpu_custom_call.1']
    %9 = vsyncpa [#allocation3], 0
    %s10 = scalar_lea.sflag [#allocation3], 1
    %11 = vsyncpa %s10, 0
    loop: start=0, step=1, limit=4
    $region2: #{tpu_custom_call.1} parent=1 // loop_pre_header
      _
    $region3: #{tpu_custom_call.1} parent=1 // loop_header
      %s13 = sphi 0, %s17
      %p14 = scmp.ge.s32.totalorder %s13, 4
      %s20 = sphi 0, %s32
      %s21 = sphi 0, %s28
      %s22 = sphi 0, %s20
      %s23 = sphi 0, %s21
      %s24 = sphi 0, %s22
      %s25 = sphi 0, %s23
      %s37 = sphi 0, %s39
      %s40 = sphi 0, %s37
      %s41 = sphi 0, %s40
      %s57 = sphi 0, %s41
      %s63 = sphi 0, %s65
      %s66 = sphi 0, %s63
      %s67 = sphi 0, %s66
      %s83 = sphi 0, %s67
      %s87 = sphi 0, %s87
      %s89 = sphi 0, %s87
      %s90 = sphi 0, %s89
      %s104 = sphi 0, %s90
      %s108 = sphi 0, %s108
      %s110 = sphi 0, %s108
      %s111 = sphi 0, %s110
      %s125 = sphi 0, %s111
      %s133 = sphi 0, %s135
      %s136 = sphi 0, %s133
      %s137 = sphi 0, %s136
      %s153 = sphi 0, %s137
    $region4: #{tpu_custom_call.1} parent=1 // loop_header_branch
      %16 = sbr.rel (%p14) target = $region8
    $region5: #{tpu_custom_call.1} parent=1 // loop_body
      %s18 = ssub.s32 %s13, 1
      %s19 = ssub.s32 %s13, 2
      %s26 = sadd.s32 1, %s21
      %p27 = scmp.ge.s32.totalorder %s26, 1
      %s28 = scalar_select %p27, 0, %s26
      %s29 = sadd.s32 1, %s20
      %s30 = scalar_select %p27, %s29, %s20
      %p31 = scmp.ge.s32.totalorder %s30, 2
      %s32 = scalar_select %p31, 0, %s30
      %s33 = ssub.s32 %s20, %s32
      %s34 = ssub.s32 %s21, %s28
      %s35 = sor.u32 %s33, %s34
      %p36 = scmp.eq.s32.totalorder %s35, 0
      %s38 = sadd.s32 %s37, 1
      %s39 = scalar_select %p36, %s37, %s38
      %p42 = pneg %p36
      %p43 = scmp.eq.s32.totalorder %s13, 1
      %p44 = por %p42, %p43
      %p45 = scmp.ne.s32.totalorder %s37, %s40
      %p46 = scmp.eq.s32.totalorder %s13, 0
      %p47 = por %p45, %p46
      %p48 = scmp.ne.s32.totalorder %s37, %s40
      %p49 = scmp.eq.s32.totalorder %s18, 1
      %p50 = por %p48, %p49
      %p51 = scmp.ne.s32.totalorder %s40, %s41
      %p52 = scmp.eq.s32.totalorder %s18, 0
      %p53 = por %p51, %p52
      %p54 = scmp.ne.s32.totalorder %s40, %s41
      %p55 = scmp.eq.s32.totalorder %s19, 1
      %p56 = por %p54, %p55
      %p58 = scmp.ne.s32.totalorder %s41, %s57
      %p59 = scmp.eq.s32.totalorder %s19, 0
      %p60 = por %p58, %p59
      %s61 = ssub.s32 %s20, %s32
      %p62 = scmp.eq.s32.totalorder %s61, 0
      %s64 = sadd.s32 %s63, 1
      %s65 = scalar_select %p62, %s63, %s64
      %p68 = pneg %p62
      %p69 = scmp.eq.s32.totalorder %s13, 1
      %p70 = por %p68, %p69
      %p71 = scmp.ne.s32.totalorder %s63, %s66
      %p72 = scmp.eq.s32.totalorder %s13, 0
      %p73 = por %p71, %p72
      %p74 = scmp.ne.s32.totalorder %s63, %s66
      %p75 = scmp.eq.s32.totalorder %s18, 1
      %p76 = por %p74, %p75
      %p77 = scmp.ne.s32.totalorder %s66, %s67
      %p78 = scmp.eq.s32.totalorder %s18, 0
      %p79 = por %p77, %p78
      %p80 = scmp.ne.s32.totalorder %s66, %s67
      %p81 = scmp.eq.s32.totalorder %s19, 1
      %p82 = por %p80, %p81
      %p84 = scmp.ne.s32.totalorder %s67, %s83
      %p85 = scmp.eq.s32.totalorder %s19, 0
      %p86 = por %p84, %p85
      %s88 = sadd.s32 %s87, 1
      %p91 = scmp.eq.s32.totalorder %s13, 1
      %p92 = scmp.ne.s32.totalorder %s87, %s89
      %p93 = scmp.eq.s32.totalorder %s13, 0
      %p94 = por %p92, %p93
      %p95 = scmp.ne.s32.totalorder %s87, %s89
      %p96 = scmp.eq.s32.totalorder %s18, 1
      %p97 = por %p95, %p96
      %p98 = scmp.ne.s32.totalorder %s89, %s90
      %p99 = scmp.eq.s32.totalorder %s18, 0
      %p100 = por %p98, %p99
      %p101 = scmp.ne.s32.totalorder %s89, %s90
      %p102 = scmp.eq.s32.totalorder %s19, 1
      %p103 = por %p101, %p102
      %p105 = scmp.ne.s32.totalorder %s90, %s104
      %p106 = scmp.eq.s32.totalorder %s19, 0
      %p107 = por %p105, %p106
      %s109 = sadd.s32 %s108, 1
      %p112 = scmp.eq.s32.totalorder %s13, 1
      %p113 = scmp.ne.s32.totalorder %s108, %s110
      %p114 = scmp.eq.s32.totalorder %s13, 0
      %p115 = por %p113, %p114
      %p116 = scmp.ne.s32.totalorder %s108, %s110
      %p117 = scmp.eq.s32.totalorder %s18, 1
      %p118 = por %p116, %p117
      %p119 = scmp.ne.s32.totalorder %s110, %s111
      %p120 = scmp.eq.s32.totalorder %s18, 0
      %p121 = por %p119, %p120
      %p122 = scmp.ne.s32.totalorder %s110, %s111
      %p123 = scmp.eq.s32.totalorder %s19, 1
      %p124 = por %p122, %p123
      %p126 = scmp.ne.s32.totalorder %s111, %s125
      %p127 = scmp.eq.s32.totalorder %s19, 0
      %p128 = por %p126, %p127
      %s129 = ssub.s32 %s20, %s32
      %s130 = ssub.s32 %s21, %s28
      %s131 = sor.u32 %s129, %s130
      %p132 = scmp.eq.s32.totalorder %s131, 0
      %s134 = sadd.s32 %s133, 1
      %s135 = scalar_select %p132, %s133, %s134
      %p138 = pneg %p132
      %p139 = scmp.eq.s32.totalorder %s13, 1
      %p140 = por %p138, %p139
      %p141 = scmp.ne.s32.totalorder %s133, %s136
      %p142 = scmp.eq.s32.totalorder %s13, 0
      %p143 = por %p141, %p142
      %p144 = scmp.ne.s32.totalorder %s133, %s136
      %p145 = scmp.eq.s32.totalorder %s18, 1
      %p146 = por %p144, %p145
      %p147 = scmp.ne.s32.totalorder %s136, %s137
      %p148 = scmp.eq.s32.totalorder %s18, 0
      %p149 = por %p147, %p148
      %p150 = scmp.ne.s32.totalorder %s136, %s137
      %p151 = scmp.eq.s32.totalorder %s19, 1
      %p152 = por %p150, %p151
      %p154 = scmp.ne.s32.totalorder %s137, %s153
      %p155 = scmp.eq.s32.totalorder %s19, 0
      %p156 = por %p154, %p155
      %p157 = scmp.le.s32.totalorder 1, %s13
      %p158 = scmp.lt.s32.totalorder %s13, 3
      %p159 = pnand %p157, %p158
      %p160 = pneg %p159
      // Predicated region
      $region9: #{tpu_custom_call.1} parent=5 // pred_check
        _
      $region10: #{tpu_custom_call.1} parent=5 // pred_check_branch
        %162 = sbr.rel (%p159) target = $region12
      $region11: #{tpu_custom_call.1} parent=5 // pred_region
        %s163 = ssub.s32 %s13, 1
        // Predicated region
        $region13: #{tpu_custom_call.1} parent=11 // pred_check
          %p164 = pneg %p100
        $region14: #{tpu_custom_call.1} parent=11 // pred_check_branch
          %166 = sbr.rel (%p164) target = $region16
        $region15: #{tpu_custom_call.1} parent=11 // pred_region
          _
        $region16: #{tpu_custom_call.1} parent=11 // pred_fallthru
          _
        // Predicated region
        $region17: #{tpu_custom_call.1} parent=11 // pred_check
          %p167 = pneg %p121
        $region18: #{tpu_custom_call.1} parent=11 // pred_check_branch
          %169 = sbr.rel (%p167) target = $region20
        $region19: #{tpu_custom_call.1} parent=11 // pred_region
          _
        $region20: #{tpu_custom_call.1} parent=11 // pred_fallthru
          _
      $region12: #{tpu_custom_call.1} parent=5 // pred_fallthru
        _
      %p170 = scmp.lt.s32.totalorder %s13, 2
      // Predicated region
      $region21: #{tpu_custom_call.1} parent=5 // pred_check
        %p171 = pneg %p170
      $region22: #{tpu_custom_call.1} parent=5 // pred_check_branch
        %173 = sbr.rel (%p171) target = $region24
      $region23: #{tpu_custom_call.1} parent=5 // pred_region
        // Predicated region
        $region25: #{tpu_custom_call.1} parent=23 // pred_check
          %p174 = pneg %p47
        $region26: #{tpu_custom_call.1} parent=23 // pred_check_branch
          %176 = sbr.rel (%p174) target = $region28
        $region27: #{tpu_custom_call.1} parent=23 // pred_region
          %p177 = scmp.lt.s32.totalorder %s20, 1
          %s178 = scalar_select %p177, %s20, 1
          %p179 = scmp.lt.s32.totalorder %s21, 0
          %s180 = scalar_select %p179, %s21, 0
          %s181 = sadd.s32 %s180, %s178
          %s182 = smul.addr %s181, 8
          %s183 = scalar_lea.vmem %s0, %s182
        $region28: #{tpu_custom_call.1} parent=23 // pred_fallthru
          _
        // Predicated region
        $region29: #{tpu_custom_call.1} parent=23 // pred_check
          %p184 = pneg %p73
        $region30: #{tpu_custom_call.1} parent=23 // pred_check_branch
          %186 = sbr.rel (%p184) target = $region32
        $region31: #{tpu_custom_call.1} parent=23 // pred_region
          %p187 = scmp.lt.s32.totalorder %s20, 1
          %s188 = scalar_select %p187, %s20, 1
          %s189 = smul.addr %s188, 8
          %s190 = scalar_lea.vmem %s1, %s189
        $region32: #{tpu_custom_call.1} parent=23 // pred_fallthru
          _
      $region24: #{tpu_custom_call.1} parent=5 // pred_fallthru
        _
      %p191 = scmp.le.s32.totalorder 1, %s13
      %p192 = scmp.lt.s32.totalorder %s13, 3
      %p193 = pnand %p191, %p192
      %p194 = pneg %p193
      // Predicated region
      $region33: #{tpu_custom_call.1} parent=5 // pred_check
        _
      $region34: #{tpu_custom_call.1} parent=5 // pred_check_branch
        %196 = sbr.rel (%p193) target = $region36
      $region35: #{tpu_custom_call.1} parent=5 // pred_region
        %s197 = ssub.s32 %s13, 1
        %p198 = scmp.lt.s32.totalorder %s22, 1
        %s199 = scalar_select %p198, %s22, 1
        %p200 = scmp.lt.s32.totalorder %s23, 0
        %s201 = scalar_select %p200, %s23, 0
        %s202 = sadd.s32 %s201, %s199
        %s203 = smul.addr %s202, 8
        %s204 = scalar_lea.vmem %s0, %s203
        %p205 = pneg %p53
        %p206 = pneg %p50
        %p207 = scmp.lt.s32.totalorder %s22, 1
        %s208 = scalar_select %p207, %s22, 1
        %s209 = smul.addr %s208, 8
        %s210 = scalar_lea.vmem %s1, %s209
        %p211 = pneg %p79
        %p212 = pneg %p76
        %p213 = pneg %p100
        %p214 = pneg %p97
        %p215 = pneg %p121
        %p216 = pneg %p118
        %p217 = pneg %p149
        %p218 = pneg %p146
        %s219 = sand.u32 %s136, 1
        %s220 = scalar_lea.sflag [#allocation3], %s219
        %s221 = sand.u32 %s136, 1
        %s222 = smul.addr %s221, 4
        %s223 = scalar_lea.vmem [#allocation2], %s222
        %p224 = scmp.lt.s32.totalorder %s22, 1
        %s225 = scalar_select %p224, %s22, 1
        %p226 = scmp.lt.s32.totalorder %s23, 0
        %s227 = scalar_select %p226, %s23, 0
        %s228 = sadd.s32 %s227, %s225
        %s229 = smul.addr %s228, 8
        %s230 = scalar_lea.vmem %s0, %s229
        %p231 = scmp.lt.s32.totalorder %s22, 1
        %s232 = scalar_select %p231, %s22, 1
        %s233 = smul.addr %s232, 8
        %s234 = scalar_lea.vmem %s1, %s233
        %v236 = vld [vmem:[%s230] sm:$0xff]
        %v237 = vld [vmem:[%s234] sm:$0x3f]
        %vm238 = vcmask 261120
        %v239 = vsel %vm238, %v236, 0.0
        %240 = vadd.xlane.f32.xlu0 %v239
        %v241 = vpop.xlane.xlu0 %240
        %v242 = vrcp.pop 32.0
        %v243 = vmul.f32 %v241, %v242
        %v244 = vsub.f32 %v236, %v243
        %v245 = vmul.f32 %v244, %v244
        %v246 = vsel %vm238, %v245, 0.0
        %247 = vadd.xlane.f32.xlu0 %v246
        %v248 = vpop.xlane.xlu0 %247
        %v249 = vmul.f32 %v248, %v242
        %v250 = vadd.f32 %v249, 1e-06
        %v251 = vrsqrt.pop %v250
        %v252 = vmul.f32 %v244, %v251
        %v253 = vadd.f32 %v237, 1.0
        %v254 = vlaneseq
        %v255 = vshrl.u32 %v254, 7
        %v256 = vsub.s32 1, %v255
        %v257 = vrot.slane %v253, %v256
        %v258 = vmul.f32 %v252, %v257
        %v259 = vlaneseq
        %v260 = vshrl.u32 %v259, 7
        %v261 = vsub.s32 0, %v260
        %v262 = vrot.slane %v237, %v261
        %v263 = vadd.f32 %v258, %v262
        %v264 = vpack.c.bf16 %v263, %v263
        %v265 = vld [vmem:[%s2] sm:$0xf]
        %v266 = vld [vmem:[%s2 + $0x4] sm:$0xf]
        %v267 = vld [vmem:[%s2 + $0x8] sm:$0xf]
        %v268 = vld [vmem:[%s2 + $0xc] sm:$0xf]
        %v269 = vld [vmem:[%s3] sm:$0x1]
        %v271 = vlaneseq
        %v272 = vshrl.u32 %v271, 7
        %v273 = vsub.s32 0, %v272
        %v274 = vrot.slane %v269, %v273
        %v280 = vunpack.c.l.b16 %v265
        %v281 = vunpack.c.l.b16 %v266
        %v282 = vunpack.c.l.b16 %v267
        %v283 = vunpack.c.l.b16 %v268
        %v284 = vpack.c.b16 %v281, %v280
        %v285 = vpack.c.b16 %v283, %v282
        %v289 = vsel %vm238, %v264, 0
        %291 = vmatprep.subr.bf16.mxu0 0
        %292 = vmatpush1.bf16.msra.mxu0 %v284
        %293 = vmatprep.subr.bf16.mxu0 0
        %294 = vmatpush1.bf16.msra.mxu0 %v285
        %295 = vmatprep.subr.bf16.mxu0 0
        %296 = vmatpush1.bf16.msra.mxu0 0
        %297 = vmatprep.subr.bf16.mxu0 0
        %298 = vmatpush1.bf16.msra.mxu0 0
        %299 = vmatprep.subr.bf16.mxu0 0
        %300 = vmatpush1.bf16.msra.mxu0 0
        %301 = vmatprep.subr.bf16.mxu0 0
        %302 = vmatpush1.bf16.msra.mxu0 0
        %303 = vmatprep.subr.bf16.mxu0 0
        %304 = vmatpush1.bf16.msra.mxu0 0
        %305 = vmatprep.subr.bf16.mxu0 0
        %306 = vmatpush1.bf16.msra.mxu0 0
        %307 = vmatprep.subr.bf16.mxu0 0
        %308 = vmatpush1.bf16.msra.mxu0 0
        %309 = vmatprep.subr.bf16.mxu0 0
        %310 = vmatpush1.bf16.msra.mxu0 0
        %311 = vmatprep.subr.bf16.mxu0 0
        %312 = vmatpush1.bf16.msra.mxu0 0
        %313 = vmatprep.subr.bf16.mxu0 0
        %314 = vmatpush1.bf16.msra.mxu0 0
        %315 = vmatprep.subr.bf16.mxu0 0
        %316 = vmatpush1.bf16.msra.mxu0 0
        %317 = vmatprep.subr.bf16.mxu0 0
        %318 = vmatpush1.bf16.msra.mxu0 0
        %319 = vmatprep.subr.bf16.mxu0 0
        %320 = vmatpush1.bf16.msra.mxu0 0
        %321 = vmatprep.subr.bf16.mxu0 0
        %322 = vmatpush1.bf16.msra.mxu0 0
        %323 = vmatprep.mubr.bf16.mxu0 0
        %324 = vmatmul.mubr.bf16.gmra.mrb[0].mxu0 %v289
        %v325 = vpop.f32.mrb[0].mxu0
        %v326 = vadd.f32 %v274, %v325
        %v327 = vpop.f32.mrb[0].mxu0
        %v328 = vpop.f32.mrb[0].mxu0
        %v329 = vpop.f32.mrb[0].mxu0
        %330 = vdwg.mxu0
        %v331 = vlaneseq
        %v332 = vand.u32 %v331, 127
        %vm333 = vcmp.lt.s32.totalorder %v332, 32
        %v334 = vsel %vm333, 0.35355338, 1.0
        %v335 = vmul.f32 %v326, %v334
        %v336 = vpack.c.bf16 %v335, %v335
        %vm337 = vcmask 781312
        %338 = vst.msk [vmem:[%s223] sm:$0xf] %vm337, %v336
        %s339 = sand.u32 %s136, 1
        %s340 = scalar_lea.sflag [#allocation3], %s339
        %s341 = sand.u32 %s136, 1
        %s342 = smul.addr %s341, 4
        %s343 = scalar_lea.vmem [#allocation2], %s342
        // Predicated region
        $region37: #{tpu_custom_call.1} parent=35 // pred_check
          %p344 = pneg %p146
        $region38: #{tpu_custom_call.1} parent=35 // pred_check_branch
          %346 = sbr.rel (%p344) target = $region40
        $region39: #{tpu_custom_call.1} parent=35 // pred_region
          %s348 = ssub.s32 64, 64
          %349 = vsyncadd %s340, %s348
          %s350 = sadd.s32 %s23, %s22
          %s351 = smul.addr %s350, 64
          %s352 = scalar_lea.hbm %s4, %s351
          %s354 = sshll.u32 %s343, 4
          %s355 = int_to_ptr.vmem [resolvable:$true] %s354
          %357 = dma.vmem_to_hbm [thread:$0]  %s355, 64, %s352, %s340
        $region40: #{tpu_custom_call.1} parent=35 // pred_fallthru
          _
      $region36: #{tpu_custom_call.1} parent=5 // pred_fallthru
        _
      %p358 = scmp.le.s32.totalorder 2, %s13
      // Predicated region
      $region41: #{tpu_custom_call.1} parent=5 // pred_check
        %p359 = pneg %p358
      $region42: #{tpu_custom_call.1} parent=5 // pred_check_branch
        %361 = sbr.rel (%p359) target = $region44
      $region43: #{tpu_custom_call.1} parent=5 // pred_region
        %s362 = ssub.s32 %s13, 2
        // Predicated region
        $region45: #{tpu_custom_call.1} parent=43 // pred_check
          %p363 = pneg %p152
        $region46: #{tpu_custom_call.1} parent=43 // pred_check_branch
          %365 = sbr.rel (%p363) target = $region48
        $region47: #{tpu_custom_call.1} parent=43 // pred_region
          %s366 = sand.u32 %s137, 1
          %s367 = scalar_lea.sflag [#allocation3], %s366
          %s368 = sand.u32 %s137, 1
          %s369 = smul.addr %s368, 4
          %s370 = scalar_lea.vmem [#allocation2], %s369
          %371 = dma.done %s367, 64
        $region48: #{tpu_custom_call.1} parent=43 // pred_fallthru
          _
      $region44: #{tpu_custom_call.1} parent=5 // pred_fallthru
        _
    $region6: #{tpu_custom_call.1} parent=1 // loop_footer
      %s17 = sadd.s32 1, %s13
    $region7: #{tpu_custom_call.1} parent=1 // loop_footer_branch
      %12 = sbr.rel target = $region3
    $region8: #{tpu_custom_call.1} parent=1 // loop_exit
      _
    %372 = vsyncpa [#allocation3], 1
    %s373 = scalar_lea.sflag [#allocation3], 1
    %374 = vsyncpa %s373, 1

</llo_original>
